<compile_context>
chip_gen: v6e
topology: v6e:2x2x1
jax: 0.10.0
libtpu: 0.0.40
codegen_flags: <defaults>
</compile_context>

<pallas_src>
import functools
from itertools import permutations

import jax
import jax.numpy as jnp
from jax.experimental import pallas as pl
from jax.experimental.pallas import tpu as pltpu

EPS = 1e-8
_LANE = 128
_MAX_BN = 128
_INPUT_VMEM_BUDGET = 12 * 1024 * 1024   # bytes for (2K inputs) x (2 buffers)


def _upit_kernel(*args, num_spks, block_s, total_s, need_s_mask):
    K = num_spks
    est_refs = args[:K]                    # K x (bN, bS) separated signals
    ref_refs = args[K:2 * K]               # K x (bN, bS) reference signals
    out_ref = args[2 * K]                  # (bN, 1) per-utterance max SI-SNR
    sx_ref, sxx_ref, sr_ref, srr_ref, sxr_ref = args[2 * K + 1:]

    j = pl.program_id(1)                   # S-chunk index (reduction axis)
    n_s = pl.num_programs(1)
    bN = out_ref.shape[0]

    @pl.when(j == 0)
    def _init():
        sx_ref[...] = jnp.zeros_like(sx_ref)
        sxx_ref[...] = jnp.zeros_like(sxx_ref)
        sr_ref[...] = jnp.zeros_like(sr_ref)
        srr_ref[...] = jnp.zeros_like(srr_ref)
        sxr_ref[...] = jnp.zeros_like(sxr_ref)

    if need_s_mask:
        # Last S block is padded with unspecified data; select (not multiply)
        # so garbage NaN/Inf in the padding cannot poison the row sums.
        lane = jax.lax.broadcasted_iota(jnp.int32, (bN, block_s), 1)
        valid = (j * block_s + lane) < total_s

        def load(ref):
            return jnp.where(valid, ref[...], 0.0)
    else:
        def load(ref):
            return ref[...]

    xs = [load(est_refs[k]) for k in range(K)]
    rs = [load(ref_refs[k]) for k in range(K)]

    # Per-speaker statistics (K reductions each, hoisted out of the pair loop).
    for k in range(K):
        sx_ref[k] += jnp.sum(xs[k], axis=-1, keepdims=True)
        sxx_ref[k] += jnp.sum(xs[k] * xs[k], axis=-1, keepdims=True)
        sr_ref[k] += jnp.sum(rs[k], axis=-1, keepdims=True)
        srr_ref[k] += jnp.sum(rs[k] * rs[k], axis=-1, keepdims=True)
    # Per-pair cross dots: one multiply + one lane reduction per (a, b).
    for a in range(K):
        for b in range(K):
            sxr_ref[a * K + b] += jnp.sum(xs[a] * rs[b], axis=-1, keepdims=True)

    @pl.when(j == n_s - 1)
    def _finalize():
        inv_s = 1.0 / float(total_s)
        xx, rr = [], []
        for k in range(K):
            sxk = sx_ref[k]
            srk = sr_ref[k]
            xx.append(sxx_ref[k] - sxk * sxk * inv_s)   # ||x_zm||^2   (bN, 1)
            rr.append(srr_ref[k] - srk * srk * inv_s)   # ||r_zm||^2   (bN, 1)

        pair = [[None] * K for _ in range(K)]
        for a in range(K):
            for b in range(K):
                d = sxr_ref[a * K + b] - sx_ref[a] * sr_ref[b] * inv_s
                # Exact division on (bN, 1) values keeps the reference eps
                # semantics; cost is negligible at this shape.
                alpha = d / (rr[b] + EPS)
                t_sq = alpha * alpha * rr[b]
                e_sq = xx[a] - 2.0 * alpha * d + t_sq
                t_nrm = jnp.sqrt(jnp.maximum(t_sq, 0.0))
                e_nrm = jnp.sqrt(jnp.maximum(e_sq, 0.0))
                pair[a][b] = 20.0 * jnp.log10(EPS + t_nrm / (e_nrm + EPS))

        # Running max over permutations (no (P, N, 1) stack / XLU reduce).
        best = None
        for p in permutations(range(K)):
            z = pair[0][p[0]]
            for a in range(1, K):
                z = z + pair[a][p[a]]
            z = z * (1.0 / K)
            best = z if best is None else jnp.maximum(best, z)

        out_ref[...] = best


def _choose_blocks(num_spks, n, s, block_n=None, block_s=None):
    bn = block_n if block_n is not None else (n if n <= _MAX_BN else _MAX_BN)
    if block_s is not None:
        return bn, block_s
    bytes_per_lane = 2 * num_spks * 2 * bn * 4     # 2K inputs x 2 bufs x f32
    cap = max(_LANE, (_INPUT_VMEM_BUDGET // bytes_per_lane) // _LANE * _LANE)
    bs = s if s <= cap else cap
    return bn, bs


def upit_loss(ests, egs, *, block_n=None, block_s=None):
    """ests, egs: lists (len = num_spks) of (N, S) arrays. Returns scalar loss."""
    num_spks = len(egs)
    ests = [jnp.asarray(e, jnp.float32) for e in ests]
    refs = [jnp.asarray(r, jnp.float32) for r in egs]
    N, S = refs[0].shape

    bN, bS = _choose_blocks(num_spks, N, S, block_n, block_s)
    grid_n = pl.cdiv(N, bN)
    grid_s = pl.cdiv(S, bS)
    need_s_mask = (grid_s * bS) != S

    in_spec = pl.BlockSpec((bN, bS), lambda i, j: (i, j))
    out_spec = pl.BlockSpec((bN, 1), lambda i, j: (i, 0))

    kernel = functools.partial(
        _upit_kernel, num_spks=num_spks, block_s=bS, total_s=S,
        need_s_mask=need_s_mask)

    max_perutt = pl.pallas_call(
        kernel,
        out_shape=jax.ShapeDtypeStruct((grid_n * bN, 1), jnp.float32),
        grid_spec=pltpu.PrefetchScalarGridSpec(
            num_scalar_prefetch=0,
            grid=(grid_n, grid_s),
            in_specs=[in_spec] * (2 * num_spks),
            out_specs=out_spec,
            scratch_shapes=[
                pltpu.VMEM((num_spks, bN, 1), jnp.float32),             # sum x
                pltpu.VMEM((num_spks, bN, 1), jnp.float32),             # sum x^2
                pltpu.VMEM((num_spks, bN, 1), jnp.float32),             # sum r
                pltpu.VMEM((num_spks, bN, 1), jnp.float32),             # sum r^2
                pltpu.VMEM((num_spks * num_spks, bN, 1), jnp.float32),  # sum x_a*r_b
            ]),
        compiler_params=pltpu.CompilerParams(
            dimension_semantics=("parallel", "arbitrary"),
            vmem_limit_bytes=32 * 1024 * 1024),
    )(*ests, *refs)

    # -sum(max over permutations) / N  (tiny reduction, done in the wrapper)
    return -jnp.sum(max_perutt[:N, 0]) / N


# ---------------- pure-JAX reference (for verification) ----------------
def _sisnr_ref(x, s, eps=EPS):
    x_zm = x - jnp.mean(x, axis=-1, keepdims=True)
    s_zm = s - jnp.mean(s, axis=-1, keepdims=True)
    t = (jnp.sum(x_zm * s_zm, axis=-1, keepdims=True) * s_zm
         / (jnp.linalg.norm(s_zm, axis=-1, keepdims=True) ** 2 + eps))
    return 20.0 * jnp.log10(
        eps + jnp.linalg.norm(t, axis=-1)
        / (jnp.linalg.norm(x_zm - t, axis=-1) + eps))


def _upit_ref(ests, egs):
    num_spks = len(egs)
    N = egs[0].shape[0]

    def score(p):
        return sum(_sisnr_ref(ests[s], egs[t]) for s, t in enumerate(p)) / len(p)

    mat = jnp.stack([score(p) for p in permutations(range(num_spks))])
    return -jnp.sum(jnp.max(mat, axis=0)) / N


if __name__ == "__main__":
    keys = jax.random.split(jax.random.PRNGKey(0), 16)

    # Case 1: 2 speakers, single S block (no masking, grid = (1, 1)).
    num_spks, N, S = 2, 8, 256
    ests = [jax.random.normal(keys[i], (N, S), dtype=jnp.float32)
            for i in range(num_spks)]
    egs = [jax.random.normal(keys[num_spks + i], (N, S), dtype=jnp.float32)
           for i in range(num_spks)]
    loss = upit_loss(ests, egs)
    jax.block_until_ready(loss)
    ref = _upit_ref(ests, egs)
    assert jnp.allclose(loss, ref, rtol=1e-3, atol=1e-3), (loss, ref)

    # Case 2: 3 speakers, forced S tiling with a ragged last block (mask path).
    num_spks, N, S = 3, 8, 384
    ests = [jax.random.normal(keys[4 + i], (N, S), dtype=jnp.float32)
            for i in range(num_spks)]
    egs = [jax.random.normal(keys[4 + num_spks + i], (N, S), dtype=jnp.float32)
           for i in range(num_spks)]
    loss = upit_loss(ests, egs, block_s=256)
    jax.block_until_ready(loss)
    ref = _upit_ref(ests, egs)
    assert jnp.allclose(loss, ref, rtol=1e-3, atol=1e-3), (loss, ref)

    print("KERNEL_OK")
</pallas_src>

<mosaic_0001>
module attributes {stable_mosaic.version = 11 : i64} {
  func.func @_upit_kernel(%arg0: i32, %arg1: i32, %arg2: memref<8x256xf32, #tpu.memory_space<vmem>>, %arg3: memref<8x256xf32, #tpu.memory_space<vmem>>, %arg4: memref<8x256xf32, #tpu.memory_space<vmem>>, %arg5: memref<8x256xf32, #tpu.memory_space<vmem>>, %arg6: memref<8x1xf32, #tpu.memory_space<vmem>>, %arg7: memref<2x8x1xf32, #tpu.memory_space<vmem>>, %arg8: memref<2x8x1xf32, #tpu.memory_space<vmem>>, %arg9: memref<2x8x1xf32, #tpu.memory_space<vmem>>, %arg10: memref<2x8x1xf32, #tpu.memory_space<vmem>>, %arg11: memref<4x8x1xf32, #tpu.memory_space<vmem>>) attributes {dimension_semantics = [#tpu.dimension_semantics<parallel>, #tpu.dimension_semantics<arbitrary>], iteration_bounds = array<i64: 1, 1>, scalar_prefetch = 0 : i64, scratch_operands = 5 : i64, tpu.core_type = #tpu.core_type<tc>, window_params = [{transform_indices = @transform_0, window_bounds = array<i64: 8, 256>}, {transform_indices = @transform_1, window_bounds = array<i64: 8, 256>}, {transform_indices = @transform_2, window_bounds = array<i64: 8, 256>}, {transform_indices = @transform_3, window_bounds = array<i64: 8, 256>}, {transform_indices = @transform_4, window_bounds = array<i64: 8, 1>}]} {
    %c0_i32 = arith.constant 0 : i32
    %0 = arith.cmpi eq, %arg1, %c0_i32 : i32
    %1 = arith.extui %0 : i1 to i32
    %c0_i32_0 = arith.constant 0 : i32
    %2 = arith.cmpi ne, %1, %c0_i32_0 : i32
    scf.if %2 {
      %cst_90 = arith.constant 0.000000e+00 : f32
      %114 = vector.broadcast %cst_90 : f32 to vector<2x8x1xf32>
      %c0_91 = arith.constant 0 : index
      %c0_92 = arith.constant 0 : index
      %c0_93 = arith.constant 0 : index
      %115 = vector.load %arg7[%c0_91, %c0_92, %c0_93] : memref<2x8x1xf32, #tpu.memory_space<vmem>>, vector<2x8x1xf32>
      tpu.vector_store %arg7[%c0_91, %c0_92, %c0_93], %114 {strides = array<i32>} : memref<2x8x1xf32, #tpu.memory_space<vmem>>, vector<2x8x1xf32>,
      %cst_94 = arith.constant 0.000000e+00 : f32
      %116 = vector.broadcast %cst_94 : f32 to vector<2x8x1xf32>
      %c0_95 = arith.constant 0 : index
      %c0_96 = arith.constant 0 : index
      %c0_97 = arith.constant 0 : index
      %117 = vector.load %arg8[%c0_95, %c0_96, %c0_97] : memref<2x8x1xf32, #tpu.memory_space<vmem>>, vector<2x8x1xf32>
      tpu.vector_store %arg8[%c0_95, %c0_96, %c0_97], %116 {strides = array<i32>} : memref<2x8x1xf32, #tpu.memory_space<vmem>>, vector<2x8x1xf32>,
      %cst_98 = arith.constant 0.000000e+00 : f32
      %118 = vector.broadcast %cst_98 : f32 to vector<2x8x1xf32>
      %c0_99 = arith.constant 0 : index
      %c0_100 = arith.constant 0 : index
      %c0_101 = arith.constant 0 : index
      %119 = vector.load %arg9[%c0_99, %c0_100, %c0_101] : memref<2x8x1xf32, #tpu.memory_space<vmem>>, vector<2x8x1xf32>
      tpu.vector_store %arg9[%c0_99, %c0_100, %c0_101], %118 {strides = array<i32>} : memref<2x8x1xf32, #tpu.memory_space<vmem>>, vector<2x8x1xf32>,
      %cst_102 = arith.constant 0.000000e+00 : f32
      %120 = vector.broadcast %cst_102 : f32 to vector<2x8x1xf32>
      %c0_103 = arith.constant 0 : index
      %c0_104 = arith.constant 0 : index
      %c0_105 = arith.constant 0 : index
      %121 = vector.load %arg10[%c0_103, %c0_104, %c0_105] : memref<2x8x1xf32, #tpu.memory_space<vmem>>, vector<2x8x1xf32>
      tpu.vector_store %arg10[%c0_103, %c0_104, %c0_105], %120 {strides = array<i32>} : memref<2x8x1xf32, #tpu.memory_space<vmem>>, vector<2x8x1xf32>,
      %cst_106 = arith.constant 0.000000e+00 : f32
      %122 = vector.broadcast %cst_106 : f32 to vector<4x8x1xf32>
      %c0_107 = arith.constant 0 : index
      %c0_108 = arith.constant 0 : index
      %c0_109 = arith.constant 0 : index
      %123 = vector.load %arg11[%c0_107, %c0_108, %c0_109] : memref<4x8x1xf32, #tpu.memory_space<vmem>>, vector<4x8x1xf32>
      tpu.vector_store %arg11[%c0_107, %c0_108, %c0_109], %122 {strides = array<i32>} : memref<4x8x1xf32, #tpu.memory_space<vmem>>, vector<4x8x1xf32>,
    } else {
    }
    %c0 = arith.constant 0 : index
    %c0_1 = arith.constant 0 : index
    %3 = vector.load %arg2[%c0, %c0_1] : memref<8x256xf32, #tpu.memory_space<vmem>>, vector<8x256xf32>
    %c0_2 = arith.constant 0 : index
    %c0_3 = arith.constant 0 : index
    %4 = vector.load %arg3[%c0_2, %c0_3] : memref<8x256xf32, #tpu.memory_space<vmem>>, vector<8x256xf32>
    %c0_4 = arith.constant 0 : index
    %c0_5 = arith.constant 0 : index
    %5 = vector.load %arg4[%c0_4, %c0_5] : memref<8x256xf32, #tpu.memory_space<vmem>>, vector<8x256xf32>
    %c0_6 = arith.constant 0 : index
    %c0_7 = arith.constant 0 : index
    %6 = vector.load %arg5[%c0_6, %c0_7] : memref<8x256xf32, #tpu.memory_space<vmem>>, vector<8x256xf32>
    %c0_8 = arith.constant 0 : index
    %c0_9 = arith.constant 0 : index
    %c0_10 = arith.constant 0 : index
    %7 = vector.load %arg7[%c0_8, %c0_9, %c0_10] : memref<2x8x1xf32, #tpu.memory_space<vmem>>, vector<1x8x1xf32>
    %8 = vector.shape_cast %7 : vector<1x8x1xf32> to vector<8x1xf32>
    %cst = arith.constant dense<0.000000e+00> : vector<8xf32>
    %9 = vector.multi_reduction <add>, %3, %cst [1] : vector<8x256xf32> to vector<8xf32>
    %10 = vector.shape_cast %9 : vector<8xf32> to vector<8x1xf32>
    %11 = arith.addf %8, %10 : vector<8x1xf32>
    %c0_11 = arith.constant 0 : index
    %c0_12 = arith.constant 0 : index
    %c0_13 = arith.constant 0 : index
    %12 = vector.load %arg7[%c0_11, %c0_12, %c0_13] : memref<2x8x1xf32, #tpu.memory_space<vmem>>, vector<1x8x1xf32>
    %13 = vector.shape_cast %12 : vector<1x8x1xf32> to vector<8x1xf32>
    %14 = vector.shape_cast %11 : vector<8x1xf32> to vector<1x8x1xf32>
    tpu.vector_store %arg7[%c0_11, %c0_12, %c0_13], %14 {strides = array<i32>} : memref<2x8x1xf32, #tpu.memory_space<vmem>>, vector<1x8x1xf32>,
    %c0_14 = arith.constant 0 : index
    %c0_15 = arith.constant 0 : index
    %c0_16 = arith.constant 0 : index
    %15 = vector.load %arg8[%c0_14, %c0_15, %c0_16] : memref<2x8x1xf32, #tpu.memory_space<vmem>>, vector<1x8x1xf32>
    %16 = vector.shape_cast %15 : vector<1x8x1xf32> to vector<8x1xf32>
    %17 = arith.mulf %3, %3 : vector<8x256xf32>
    %cst_17 = arith.constant dense<0.000000e+00> : vector<8xf32>
    %18 = vector.multi_reduction <add>, %17, %cst_17 [1] : vector<8x256xf32> to vector<8xf32>
    %19 = vector.shape_cast %18 : vector<8xf32> to vector<8x1xf32>
    %20 = arith.addf %16, %19 : vector<8x1xf32>
    %c0_18 = arith.constant 0 : index
    %c0_19 = arith.constant 0 : index
    %c0_20 = arith.constant 0 : index
    %21 = vector.load %arg8[%c0_18, %c0_19, %c0_20] : memref<2x8x1xf32, #tpu.memory_space<vmem>>, vector<1x8x1xf32>
    %22 = vector.shape_cast %21 : vector<1x8x1xf32> to vector<8x1xf32>
    %23 = vector.shape_cast %20 : vector<8x1xf32> to vector<1x8x1xf32>
    tpu.vector_store %arg8[%c0_18, %c0_19, %c0_20], %23 {strides = array<i32>} : memref<2x8x1xf32, #tpu.memory_space<vmem>>, vector<1x8x1xf32>,
    %c0_21 = arith.constant 0 : index
    %c0_22 = arith.constant 0 : index
    %c0_23 = arith.constant 0 : index
    %24 = vector.load %arg9[%c0_21, %c0_22, %c0_23] : memref<2x8x1xf32, #tpu.memory_space<vmem>>, vector<1x8x1xf32>
    %25 = vector.shape_cast %24 : vector<1x8x1xf32> to vector<8x1xf32>
    %cst_24 = arith.constant dense<0.000000e+00> : vector<8xf32>
    %26 = vector.multi_reduction <add>, %5, %cst_24 [1] : vector<8x256xf32> to vector<8xf32>
    %27 = vector.shape_cast %26 : vector<8xf32> to vector<8x1xf32>
    %28 = arith.addf %25, %27 : vector<8x1xf32>
    %c0_25 = arith.constant 0 : index
    %c0_26 = arith.constant 0 : index
    %c0_27 = arith.constant 0 : index
    %29 = vector.load %arg9[%c0_25, %c0_26, %c0_27] : memref<2x8x1xf32, #tpu.memory_space<vmem>>, vector<1x8x1xf32>
    %30 = vector.shape_cast %29 : vector<1x8x1xf32> to vector<8x1xf32>
    %31 = vector.shape_cast %28 : vector<8x1xf32> to vector<1x8x1xf32>
    tpu.vector_store %arg9[%c0_25, %c0_26, %c0_27], %31 {strides = array<i32>} : memref<2x8x1xf32, #tpu.memory_space<vmem>>, vector<1x8x1xf32>,
    %c0_28 = arith.constant 0 : index
    %c0_29 = arith.constant 0 : index
    %c0_30 = arith.constant 0 : index
    %32 = vector.load %arg10[%c0_28, %c0_29, %c0_30] : memref<2x8x1xf32, #tpu.memory_space<vmem>>, vector<1x8x1xf32>
    %33 = vector.shape_cast %32 : vector<1x8x1xf32> to vector<8x1xf32>
    %34 = arith.mulf %5, %5 : vector<8x256xf32>
    %cst_31 = arith.constant dense<0.000000e+00> : vector<8xf32>
    %35 = vector.multi_reduction <add>, %34, %cst_31 [1] : vector<8x256xf32> to vector<8xf32>
    %36 = vector.shape_cast %35 : vector<8xf32> to vector<8x1xf32>
    %37 = arith.addf %33, %36 : vector<8x1xf32>
    %c0_32 = arith.constant 0 : index
    %c0_33 = arith.constant 0 : index
    %c0_34 = arith.constant 0 : index
    %38 = vector.load %arg10[%c0_32, %c0_33, %c0_34] : memref<2x8x1xf32, #tpu.memory_space<vmem>>, vector<1x8x1xf32>
    %39 = vector.shape_cast %38 : vector<1x8x1xf32> to vector<8x1xf32>
    %40 = vector.shape_cast %37 : vector<8x1xf32> to vector<1x8x1xf32>
    tpu.vector_store %arg10[%c0_32, %c0_33, %c0_34], %40 {strides = array<i32>} : memref<2x8x1xf32, #tpu.memory_space<vmem>>, vector<1x8x1xf32>,
    %c1 = arith.constant 1 : index
    %c0_35 = arith.constant 0 : index
    %c0_36 = arith.constant 0 : index
    %41 = vector.load %arg7[%c1, %c0_35, %c0_36] : memref<2x8x1xf32, #tpu.memory_space<vmem>>, vector<1x8x1xf32>
    %42 = vector.shape_cast %41 : vector<1x8x1xf32> to vector<8x1xf32>
    %cst_37 = arith.constant dense<0.000000e+00> : vector<8xf32>
    %43 = vector.multi_reduction <add>, %4, %cst_37 [1] : vector<8x256xf32> to vector<8xf32>
    %44 = vector.shape_cast %43 : vector<8xf32> to vector<8x1xf32>
    %45 = arith.addf %42, %44 : vector<8x1xf32>
    %c1_38 = arith.constant 1 : index
    %c0_39 = arith.constant 0 : index
    %c0_40 = arith.constant 0 : index
    %46 = vector.load %arg7[%c1_38, %c0_39, %c0_40] : memref<2x8x1xf32, #tpu.memory_space<vmem>>, vector<1x8x1xf32>
    %47 = vector.shape_cast %46 : vector<1x8x1xf32> to vector<8x1xf32>
    %48 = vector.shape_cast %45 : vector<8x1xf32> to vector<1x8x1xf32>
    tpu.vector_store %arg7[%c1_38, %c0_39, %c0_40], %48 {strides = array<i32>} : memref<2x8x1xf32, #tpu.memory_space<vmem>>, vector<1x8x1xf32>,
    %c1_41 = arith.constant 1 : index
    %c0_42 = arith.constant 0 : index
    %c0_43 = arith.constant 0 : index
    %49 = vector.load %arg8[%c1_41, %c0_42, %c0_43] : memref<2x8x1xf32, #tpu.memory_space<vmem>>, vector<1x8x1xf32>
    %50 = vector.shape_cast %49 : vector<1x8x1xf32> to vector<8x1xf32>
    %51 = arith.mulf %4, %4 : vector<8x256xf32>
    %cst_44 = arith.constant dense<0.000000e+00> : vector<8xf32>
    %52 = vector.multi_reduction <add>, %51, %cst_44 [1] : vector<8x256xf32> to vector<8xf32>
    %53 = vector.shape_cast %52 : vector<8xf32> to vector<8x1xf32>
    %54 = arith.addf %50, %53 : vector<8x1xf32>
    %c1_45 = arith.constant 1 : index
    %c0_46 = arith.constant 0 : index
    %c0_47 = arith.constant 0 : index
    %55 = vector.load %arg8[%c1_45, %c0_46, %c0_47] : memref<2x8x1xf32, #tpu.memory_space<vmem>>, vector<1x8x1xf32>
    %56 = vector.shape_cast %55 : vector<1x8x1xf32> to vector<8x1xf32>
    %57 = vector.shape_cast %54 : vector<8x1xf32> to vector<1x8x1xf32>
    tpu.vector_store %arg8[%c1_45, %c0_46, %c0_47], %57 {strides = array<i32>} : memref<2x8x1xf32, #tpu.memory_space<vmem>>, vector<1x8x1xf32>,
    %c1_48 = arith.constant 1 : index
    %c0_49 = arith.constant 0 : index
    %c0_50 = arith.constant 0 : index
    %58 = vector.load %arg9[%c1_48, %c0_49, %c0_50] : memref<2x8x1xf32, #tpu.memory_space<vmem>>, vector<1x8x1xf32>
    %59 = vector.shape_cast %58 : vector<1x8x1xf32> to vector<8x1xf32>
    %cst_51 = arith.constant dense<0.000000e+00> : vector<8xf32>
    %60 = vector.multi_reduction <add>, %6, %cst_51 [1] : vector<8x256xf32> to vector<8xf32>
    %61 = vector.shape_cast %60 : vector<8xf32> to vector<8x1xf32>
    %62 = arith.addf %59, %61 : vector<8x1xf32>
    %c1_52 = arith.constant 1 : index
    %c0_53 = arith.constant 0 : index
    %c0_54 = arith.constant 0 : index
    %63 = vector.load %arg9[%c1_52, %c0_53, %c0_54] : memref<2x8x1xf32, #tpu.memory_space<vmem>>, vector<1x8x1xf32>
    %64 = vector.shape_cast %63 : vector<1x8x1xf32> to vector<8x1xf32>
    %65 = vector.shape_cast %62 : vector<8x1xf32> to vector<1x8x1xf32>
    tpu.vector_store %arg9[%c1_52, %c0_53, %c0_54], %65 {strides = array<i32>} : memref<2x8x1xf32, #tpu.memory_space<vmem>>, vector<1x8x1xf32>,
    %c1_55 = arith.constant 1 : index
    %c0_56 = arith.constant 0 : index
    %c0_57 = arith.constant 0 : index
    %66 = vector.load %arg10[%c1_55, %c0_56, %c0_57] : memref<2x8x1xf32, #tpu.memory_space<vmem>>, vector<1x8x1xf32>
    %67 = vector.shape_cast %66 : vector<1x8x1xf32> to vector<8x1xf32>
    %68 = arith.mulf %6, %6 : vector<8x256xf32>
    %cst_58 = arith.constant dense<0.000000e+00> : vector<8xf32>
    %69 = vector.multi_reduction <add>, %68, %cst_58 [1] : vector<8x256xf32> to vector<8xf32>
    %70 = vector.shape_cast %69 : vector<8xf32> to vector<8x1xf32>
    %71 = arith.addf %67, %70 : vector<8x1xf32>
    %c1_59 = arith.constant 1 : index
    %c0_60 = arith.constant 0 : index
    %c0_61 = arith.constant 0 : index
    %72 = vector.load %arg10[%c1_59, %c0_60, %c0_61] : memref<2x8x1xf32, #tpu.memory_space<vmem>>, vector<1x8x1xf32>
    %73 = vector.shape_cast %72 : vector<1x8x1xf32> to vector<8x1xf32>
    %74 = vector.shape_cast %71 : vector<8x1xf32> to vector<1x8x1xf32>
    tpu.vector_store %arg10[%c1_59, %c0_60, %c0_61], %74 {strides = array<i32>} : memref<2x8x1xf32, #tpu.memory_space<vmem>>, vector<1x8x1xf32>,
    %c0_62 = arith.constant 0 : index
    %c0_63 = arith.constant 0 : index
    %c0_64 = arith.constant 0 : index
    %75 = vector.load %arg11[%c0_62, %c0_63, %c0_64] : memref<4x8x1xf32, #tpu.memory_space<vmem>>, vector<1x8x1xf32>
    %76 = vector.shape_cast %75 : vector<1x8x1xf32> to vector<8x1xf32>
    %77 = arith.mulf %3, %5 : vector<8x256xf32>
    %cst_65 = arith.constant dense<0.000000e+00> : vector<8xf32>
    %78 = vector.multi_reduction <add>, %77, %cst_65 [1] : vector<8x256xf32> to vector<8xf32>
    %79 = vector.shape_cast %78 : vector<8xf32> to vector<8x1xf32>
    %80 = arith.addf %76, %79 : vector<8x1xf32>
    %c0_66 = arith.constant 0 : index
    %c0_67 = arith.constant 0 : index
    %c0_68 = arith.constant 0 : index
    %81 = vector.load %arg11[%c0_66, %c0_67, %c0_68] : memref<4x8x1xf32, #tpu.memory_space<vmem>>, vector<1x8x1xf32>
    %82 = vector.shape_cast %81 : vector<1x8x1xf32> to vector<8x1xf32>
    %83 = vector.shape_cast %80 : vector<8x1xf32> to vector<1x8x1xf32>
    tpu.vector_store %arg11[%c0_66, %c0_67, %c0_68], %83 {strides = array<i32>} : memref<4x8x1xf32, #tpu.memory_space<vmem>>, vector<1x8x1xf32>,
    %c1_69 = arith.constant 1 : index
    %c0_70 = arith.constant 0 : index
    %c0_71 = arith.constant 0 : index
    %84 = vector.load %arg11[%c1_69, %c0_70, %c0_71] : memref<4x8x1xf32, #tpu.memory_space<vmem>>, vector<1x8x1xf32>
    %85 = vector.shape_cast %84 : vector<1x8x1xf32> to vector<8x1xf32>
    %86 = arith.mulf %3, %6 : vector<8x256xf32>
    %cst_72 = arith.constant dense<0.000000e+00> : vector<8xf32>
    %87 = vector.multi_reduction <add>, %86, %cst_72 [1] : vector<8x256xf32> to vector<8xf32>
    %88 = vector.shape_cast %87 : vector<8xf32> to vector<8x1xf32>
    %89 = arith.addf %85, %88 : vector<8x1xf32>
    %c1_73 = arith.constant 1 : index
    %c0_74 = arith.constant 0 : index
    %c0_75 = arith.constant 0 : index
    %90 = vector.load %arg11[%c1_73, %c0_74, %c0_75] : memref<4x8x1xf32, #tpu.memory_space<vmem>>, vector<1x8x1xf32>
    %91 = vector.shape_cast %90 : vector<1x8x1xf32> to vector<8x1xf32>
    %92 = vector.shape_cast %89 : vector<8x1xf32> to vector<1x8x1xf32>
    tpu.vector_store %arg11[%c1_73, %c0_74, %c0_75], %92 {strides = array<i32>} : memref<4x8x1xf32, #tpu.memory_space<vmem>>, vector<1x8x1xf32>,
    %c2 = arith.constant 2 : index
    %c0_76 = arith.constant 0 : index
    %c0_77 = arith.constant 0 : index
    %93 = vector.load %arg11[%c2, %c0_76, %c0_77] : memref<4x8x1xf32, #tpu.memory_space<vmem>>, vector<1x8x1xf32>
    %94 = vector.shape_cast %93 : vector<1x8x1xf32> to vector<8x1xf32>
    %95 = arith.mulf %4, %5 : vector<8x256xf32>
    %cst_78 = arith.constant dense<0.000000e+00> : vector<8xf32>
    %96 = vector.multi_reduction <add>, %95, %cst_78 [1] : vector<8x256xf32> to vector<8xf32>
    %97 = vector.shape_cast %96 : vector<8xf32> to vector<8x1xf32>
    %98 = arith.addf %94, %97 : vector<8x1xf32>
    %c2_79 = arith.constant 2 : index
    %c0_80 = arith.constant 0 : index
    %c0_81 = arith.constant 0 : index
    %99 = vector.load %arg11[%c2_79, %c0_80, %c0_81] : memref<4x8x1xf32, #tpu.memory_space<vmem>>, vector<1x8x1xf32>
    %100 = vector.shape_cast %99 : vector<1x8x1xf32> to vector<8x1xf32>
    %101 = vector.shape_cast %98 : vector<8x1xf32> to vector<1x8x1xf32>
    tpu.vector_store %arg11[%c2_79, %c0_80, %c0_81], %101 {strides = array<i32>} : memref<4x8x1xf32, #tpu.memory_space<vmem>>, vector<1x8x1xf32>,
    %c3 = arith.constant 3 : index
    %c0_82 = arith.constant 0 : index
    %c0_83 = arith.constant 0 : index
    %102 = vector.load %arg11[%c3, %c0_82, %c0_83] : memref<4x8x1xf32, #tpu.memory_space<vmem>>, vector<1x8x1xf32>
    %103 = vector.shape_cast %102 : vector<1x8x1xf32> to vector<8x1xf32>
    %104 = arith.mulf %4, %6 : vector<8x256xf32>
    %cst_84 = arith.constant dense<0.000000e+00> : vector<8xf32>
    %105 = vector.multi_reduction <add>, %104, %cst_84 [1] : vector<8x256xf32> to vector<8xf32>
    %106 = vector.shape_cast %105 : vector<8xf32> to vector<8x1xf32>
    %107 = arith.addf %103, %106 : vector<8x1xf32>
    %c3_85 = arith.constant 3 : index
    %c0_86 = arith.constant 0 : index
    %c0_87 = arith.constant 0 : index
    %108 = vector.load %arg11[%c3_85, %c0_86, %c0_87] : memref<4x8x1xf32, #tpu.memory_space<vmem>>, vector<1x8x1xf32>
    %109 = vector.shape_cast %108 : vector<1x8x1xf32> to vector<8x1xf32>
    %110 = vector.shape_cast %107 : vector<8x1xf32> to vector<1x8x1xf32>
    tpu.vector_store %arg11[%c3_85, %c0_86, %c0_87], %110 {strides = array<i32>} : memref<4x8x1xf32, #tpu.memory_space<vmem>>, vector<1x8x1xf32>,
    %c0_i32_88 = arith.constant 0 : i32
    %111 = arith.cmpi eq, %arg1, %c0_i32_88 : i32
    %112 = arith.extui %111 : i1 to i32
    %c0_i32_89 = arith.constant 0 : i32
    %113 = arith.cmpi ne, %112, %c0_i32_89 : i32
    scf.if %113 {
      %c0_90 = arith.constant 0 : index
      %c0_91 = arith.constant 0 : index
      %c0_92 = arith.constant 0 : index
      %114 = vector.load %arg7[%c0_90, %c0_91, %c0_92] : memref<2x8x1xf32, #tpu.memory_space<vmem>>, vector<1x8x1xf32>
      %115 = vector.shape_cast %114 : vector<1x8x1xf32> to vector<8x1xf32>
      %c0_93 = arith.constant 0 : index
      %c0_94 = arith.constant 0 : index
      %c0_95 = arith.constant 0 : index
      %116 = vector.load %arg9[%c0_93, %c0_94, %c0_95] : memref<2x8x1xf32, #tpu.memory_space<vmem>>, vector<1x8x1xf32>
      %117 = vector.shape_cast %116 : vector<1x8x1xf32> to vector<8x1xf32>
      %c0_96 = arith.constant 0 : index
      %c0_97 = arith.constant 0 : index
      %c0_98 = arith.constant 0 : index
      %118 = vector.load %arg8[%c0_96, %c0_97, %c0_98] : memref<2x8x1xf32, #tpu.memory_space<vmem>>, vector<1x8x1xf32>
      %119 = vector.shape_cast %118 : vector<1x8x1xf32> to vector<8x1xf32>
      %120 = arith.mulf %115, %115 : vector<8x1xf32>
      %cst_99 = arith.constant 3.906250e-03 : f32
      %121 = vector.broadcast %cst_99 : f32 to vector<8x1xf32>
      %122 = arith.mulf %120, %121 : vector<8x1xf32>
      %123 = arith.subf %119, %122 : vector<8x1xf32>
      %c0_100 = arith.constant 0 : index
      %c0_101 = arith.constant 0 : index
      %c0_102 = arith.constant 0 : index
      %124 = vector.load %arg10[%c0_100, %c0_101, %c0_102] : memref<2x8x1xf32, #tpu.memory_space<vmem>>, vector<1x8x1xf32>
      %125 = vector.shape_cast %124 : vector<1x8x1xf32> to vector<8x1xf32>
      %126 = arith.mulf %117, %117 : vector<8x1xf32>
      %cst_103 = arith.constant 3.906250e-03 : f32
      %127 = vector.broadcast %cst_103 : f32 to vector<8x1xf32>
      %128 = arith.mulf %126, %127 : vector<8x1xf32>
      %129 = arith.subf %125, %128 : vector<8x1xf32>
      %c1_104 = arith.constant 1 : index
      %c0_105 = arith.constant 0 : index
      %c0_106 = arith.constant 0 : index
      %130 = vector.load %arg7[%c1_104, %c0_105, %c0_106] : memref<2x8x1xf32, #tpu.memory_space<vmem>>, vector<1x8x1xf32>
      %131 = vector.shape_cast %130 : vector<1x8x1xf32> to vector<8x1xf32>
      %c1_107 = arith.constant 1 : index
      %c0_108 = arith.constant 0 : index
      %c0_109 = arith.constant 0 : index
      %132 = vector.load %arg9[%c1_107, %c0_108, %c0_109] : memref<2x8x1xf32, #tpu.memory_space<vmem>>, vector<1x8x1xf32>
      %133 = vector.shape_cast %132 : vector<1x8x1xf32> to vector<8x1xf32>
      %c1_110 = arith.constant 1 : index
      %c0_111 = arith.constant 0 : index
      %c0_112 = arith.constant 0 : index
      %134 = vector.load %arg8[%c1_110, %c0_111, %c0_112] : memref<2x8x1xf32, #tpu.memory_space<vmem>>, vector<1x8x1xf32>
      %135 = vector.shape_cast %134 : vector<1x8x1xf32> to vector<8x1xf32>
      %136 = arith.mulf %131, %131 : vector<8x1xf32>
      %cst_113 = arith.constant 3.906250e-03 : f32
      %137 = vector.broadcast %cst_113 : f32 to vector<8x1xf32>
      %138 = arith.mulf %136, %137 : vector<8x1xf32>
      %139 = arith.subf %135, %138 : vector<8x1xf32>
      %c1_114 = arith.constant 1 : index
      %c0_115 = arith.constant 0 : index
      %c0_116 = arith.constant 0 : index
      %140 = vector.load %arg10[%c1_114, %c0_115, %c0_116] : memref<2x8x1xf32, #tpu.memory_space<vmem>>, vector<1x8x1xf32>
      %141 = vector.shape_cast %140 : vector<1x8x1xf32> to vector<8x1xf32>
      %142 = arith.mulf %133, %133 : vector<8x1xf32>
      %cst_117 = arith.constant 3.906250e-03 : f32
      %143 = vector.broadcast %cst_117 : f32 to vector<8x1xf32>
      %144 = arith.mulf %142, %143 : vector<8x1xf32>
      %145 = arith.subf %141, %144 : vector<8x1xf32>
      %c0_118 = arith.constant 0 : index
      %c0_119 = arith.constant 0 : index
      %c0_120 = arith.constant 0 : index
      %146 = vector.load %arg11[%c0_118, %c0_119, %c0_120] : memref<4x8x1xf32, #tpu.memory_space<vmem>>, vector<1x8x1xf32>
      %147 = vector.shape_cast %146 : vector<1x8x1xf32> to vector<8x1xf32>
      %c0_121 = arith.constant 0 : index
      %c0_122 = arith.constant 0 : index
      %c0_123 = arith.constant 0 : index
      %148 = vector.load %arg7[%c0_121, %c0_122, %c0_123] : memref<2x8x1xf32, #tpu.memory_space<vmem>>, vector<1x8x1xf32>
      %149 = vector.shape_cast %148 : vector<1x8x1xf32> to vector<8x1xf32>
      %c0_124 = arith.constant 0 : index
      %c0_125 = arith.constant 0 : index
      %c0_126 = arith.constant 0 : index
      %150 = vector.load %arg9[%c0_124, %c0_125, %c0_126] : memref<2x8x1xf32, #tpu.memory_space<vmem>>, vector<1x8x1xf32>
      %151 = vector.shape_cast %150 : vector<1x8x1xf32> to vector<8x1xf32>
      %152 = arith.mulf %149, %151 : vector<8x1xf32>
      %cst_127 = arith.constant 3.906250e-03 : f32
      %153 = vector.broadcast %cst_127 : f32 to vector<8x1xf32>
      %154 = arith.mulf %152, %153 : vector<8x1xf32>
      %155 = arith.subf %147, %154 : vector<8x1xf32>
      %cst_128 = arith.constant 9.99999993E-9 : f32
      %156 = vector.broadcast %cst_128 : f32 to vector<8x1xf32>
      %157 = arith.addf %129, %156 : vector<8x1xf32>
      %158 = arith.divf %155, %157 : vector<8x1xf32>
      %159 = arith.mulf %158, %158 : vector<8x1xf32>
      %160 = arith.mulf %159, %129 : vector<8x1xf32>
      %cst_129 = arith.constant 2.000000e+00 : f32
      %161 = vector.broadcast %cst_129 : f32 to vector<8x1xf32>
      %162 = arith.mulf %161, %158 : vector<8x1xf32>
      %163 = arith.mulf %162, %155 : vector<8x1xf32>
      %164 = arith.subf %123, %163 : vector<8x1xf32>
      %165 = arith.addf %164, %160 : vector<8x1xf32>
      %cst_130 = arith.constant 0.000000e+00 : f32
      %166 = vector.broadcast %cst_130 : f32 to vector<8x1xf32>
      %167 = arith.maximumf %160, %166 : vector<8x1xf32>
      %168 = math.sqrt %167 : vector<8x1xf32>
      %cst_131 = arith.constant 0.000000e+00 : f32
      %169 = vector.broadcast %cst_131 : f32 to vector<8x1xf32>
      %170 = arith.maximumf %165, %169 : vector<8x1xf32>
      %171 = math.sqrt %170 : vector<8x1xf32>
      %cst_132 = arith.constant 9.99999993E-9 : f32
      %172 = vector.broadcast %cst_132 : f32 to vector<8x1xf32>
      %173 = arith.addf %171, %172 : vector<8x1xf32>
      %174 = arith.divf %168, %173 : vector<8x1xf32>
      %cst_133 = arith.constant 9.99999993E-9 : f32
      %175 = vector.broadcast %cst_133 : f32 to vector<8x1xf32>
      %176 = arith.addf %175, %174 : vector<8x1xf32>
      %177 = math.log %176 : vector<8x1xf32>
      %cst_134 = arith.constant 0.434294492 : f32
      %178 = vector.broadcast %cst_134 : f32 to vector<8x1xf32>
      %179 = arith.mulf %177, %178 : vector<8x1xf32>
      %cst_135 = arith.constant 2.000000e+01 : f32
      %180 = vector.broadcast %cst_135 : f32 to vector<8x1xf32>
      %181 = arith.mulf %180, %179 : vector<8x1xf32>
      %c1_136 = arith.constant 1 : index
      %c0_137 = arith.constant 0 : index
      %c0_138 = arith.constant 0 : index
      %182 = vector.load %arg11[%c1_136, %c0_137, %c0_138] : memref<4x8x1xf32, #tpu.memory_space<vmem>>, vector<1x8x1xf32>
      %183 = vector.shape_cast %182 : vector<1x8x1xf32> to vector<8x1xf32>
      %c0_139 = arith.constant 0 : index
      %c0_140 = arith.constant 0 : index
      %c0_141 = arith.constant 0 : index
      %184 = vector.load %arg7[%c0_139, %c0_140, %c0_141] : memref<2x8x1xf32, #tpu.memory_space<vmem>>, vector<1x8x1xf32>
      %185 = vector.shape_cast %184 : vector<1x8x1xf32> to vector<8x1xf32>
      %c1_142 = arith.constant 1 : index
      %c0_143 = arith.constant 0 : index
      %c0_144 = arith.constant 0 : index
      %186 = vector.load %arg9[%c1_142, %c0_143, %c0_144] : memref<2x8x1xf32, #tpu.memory_space<vmem>>, vector<1x8x1xf32>
      %187 = vector.shape_cast %186 : vector<1x8x1xf32> to vector<8x1xf32>
      %188 = arith.mulf %185, %187 : vector<8x1xf32>
      %cst_145 = arith.constant 3.906250e-03 : f32
      %189 = vector.broadcast %cst_145 : f32 to vector<8x1xf32>
      %190 = arith.mulf %188, %189 : vector<8x1xf32>
      %191 = arith.subf %183, %190 : vector<8x1xf32>
      %cst_146 = arith.constant 9.99999993E-9 : f32
      %192 = vector.broadcast %cst_146 : f32 to vector<8x1xf32>
      %193 = arith.addf %145, %192 : vector<8x1xf32>
      %194 = arith.divf %191, %193 : vector<8x1xf32>
      %195 = arith.mulf %194, %194 : vector<8x1xf32>
      %196 = arith.mulf %195, %145 : vector<8x1xf32>
      %cst_147 = arith.constant 2.000000e+00 : f32
      %197 = vector.broadcast %cst_147 : f32 to vector<8x1xf32>
      %198 = arith.mulf %197, %194 : vector<8x1xf32>
      %199 = arith.mulf %198, %191 : vector<8x1xf32>
      %200 = arith.subf %123, %199 : vector<8x1xf32>
      %201 = arith.addf %200, %196 : vector<8x1xf32>
      %cst_148 = arith.constant 0.000000e+00 : f32
      %202 = vector.broadcast %cst_148 : f32 to vector<8x1xf32>
      %203 = arith.maximumf %196, %202 : vector<8x1xf32>
      %204 = math.sqrt %203 : vector<8x1xf32>
      %cst_149 = arith.constant 0.000000e+00 : f32
      %205 = vector.broadcast %cst_149 : f32 to vector<8x1xf32>
      %206 = arith.maximumf %201, %205 : vector<8x1xf32>
      %207 = math.sqrt %206 : vector<8x1xf32>
      %cst_150 = arith.constant 9.99999993E-9 : f32
      %208 = vector.broadcast %cst_150 : f32 to vector<8x1xf32>
      %209 = arith.addf %207, %208 : vector<8x1xf32>
      %210 = arith.divf %204, %209 : vector<8x1xf32>
      %cst_151 = arith.constant 9.99999993E-9 : f32
      %211 = vector.broadcast %cst_151 : f32 to vector<8x1xf32>
      %212 = arith.addf %211, %210 : vector<8x1xf32>
      %213 = math.log %212 : vector<8x1xf32>
      %cst_152 = arith.constant 0.434294492 : f32
      %214 = vector.broadcast %cst_152 : f32 to vector<8x1xf32>
      %215 = arith.mulf %213, %214 : vector<8x1xf32>
      %cst_153 = arith.constant 2.000000e+01 : f32
      %216 = vector.broadcast %cst_153 : f32 to vector<8x1xf32>
      %217 = arith.mulf %216, %215 : vector<8x1xf32>
      %c2_154 = arith.constant 2 : index
      %c0_155 = arith.constant 0 : index
      %c0_156 = arith.constant 0 : index
      %218 = vector.load %arg11[%c2_154, %c0_155, %c0_156] : memref<4x8x1xf32, #tpu.memory_space<vmem>>, vector<1x8x1xf32>
      %219 = vector.shape_cast %218 : vector<1x8x1xf32> to vector<8x1xf32>
      %c1_157 = arith.constant 1 : index
      %c0_158 = arith.constant 0 : index
      %c0_159 = arith.constant 0 : index
      %220 = vector.load %arg7[%c1_157, %c0_158, %c0_159] : memref<2x8x1xf32, #tpu.memory_space<vmem>>, vector<1x8x1xf32>
      %221 = vector.shape_cast %220 : vector<1x8x1xf32> to vector<8x1xf32>
      %c0_160 = arith.constant 0 : index
      %c0_161 = arith.constant 0 : index
      %c0_162 = arith.constant 0 : index
      %222 = vector.load %arg9[%c0_160, %c0_161, %c0_162] : memref<2x8x1xf32, #tpu.memory_space<vmem>>, vector<1x8x1xf32>
      %223 = vector.shape_cast %222 : vector<1x8x1xf32> to vector<8x1xf32>
      %224 = arith.mulf %221, %223 : vector<8x1xf32>
      %cst_163 = arith.constant 3.906250e-03 : f32
      %225 = vector.broadcast %cst_163 : f32 to vector<8x1xf32>
      %226 = arith.mulf %224, %225 : vector<8x1xf32>
      %227 = arith.subf %219, %226 : vector<8x1xf32>
      %cst_164 = arith.constant 9.99999993E-9 : f32
      %228 = vector.broadcast %cst_164 : f32 to vector<8x1xf32>
      %229 = arith.addf %129, %228 : vector<8x1xf32>
      %230 = arith.divf %227, %229 : vector<8x1xf32>
      %231 = arith.mulf %230, %230 : vector<8x1xf32>
      %232 = arith.mulf %231, %129 : vector<8x1xf32>
      %cst_165 = arith.constant 2.000000e+00 : f32
      %233 = vector.broadcast %cst_165 : f32 to vector<8x1xf32>
      %234 = arith.mulf %233, %230 : vector<8x1xf32>
      %235 = arith.mulf %234, %227 : vector<8x1xf32>
      %236 = arith.subf %139, %235 : vector<8x1xf32>
      %237 = arith.addf %236, %232 : vector<8x1xf32>
      %cst_166 = arith.constant 0.000000e+00 : f32
      %238 = vector.broadcast %cst_166 : f32 to vector<8x1xf32>
      %239 = arith.maximumf %232, %238 : vector<8x1xf32>
      %240 = math.sqrt %239 : vector<8x1xf32>
      %cst_167 = arith.constant 0.000000e+00 : f32
      %241 = vector.broadcast %cst_167 : f32 to vector<8x1xf32>
      %242 = arith.maximumf %237, %241 : vector<8x1xf32>
      %243 = math.sqrt %242 : vector<8x1xf32>
      %cst_168 = arith.constant 9.99999993E-9 : f32
      %244 = vector.broadcast %cst_168 : f32 to vector<8x1xf32>
      %245 = arith.addf %243, %244 : vector<8x1xf32>
      %246 = arith.divf %240, %245 : vector<8x1xf32>
      %cst_169 = arith.constant 9.99999993E-9 : f32
      %247 = vector.broadcast %cst_169 : f32 to vector<8x1xf32>
      %248 = arith.addf %247, %246 : vector<8x1xf32>
      %249 = math.log %248 : vector<8x1xf32>
      %cst_170 = arith.constant 0.434294492 : f32
      %250 = vector.broadcast %cst_170 : f32 to vector<8x1xf32>
      %251 = arith.mulf %249, %250 : vector<8x1xf32>
      %cst_171 = arith.constant 2.000000e+01 : f32
      %252 = vector.broadcast %cst_171 : f32 to vector<8x1xf32>
      %253 = arith.mulf %252, %251 : vector<8x1xf32>
      %c3_172 = arith.constant 3 : index
      %c0_173 = arith.constant 0 : index
      %c0_174 = arith.constant 0 : index
      %254 = vector.load %arg11[%c3_172, %c0_173, %c0_174] : memref<4x8x1xf32, #tpu.memory_space<vmem>>, vector<1x8x1xf32>
      %255 = vector.shape_cast %254 : vector<1x8x1xf32> to vector<8x1xf32>
      %c1_175 = arith.constant 1 : index
      %c0_176 = arith.constant 0 : index
      %c0_177 = arith.constant 0 : index
      %256 = vector.load %arg7[%c1_175, %c0_176, %c0_177] : memref<2x8x1xf32, #tpu.memory_space<vmem>>, vector<1x8x1xf32>
      %257 = vector.shape_cast %256 : vector<1x8x1xf32> to vector<8x1xf32>
      %c1_178 = arith.constant 1 : index
      %c0_179 = arith.constant 0 : index
      %c0_180 = arith.constant 0 : index
      %258 = vector.load %arg9[%c1_178, %c0_179, %c0_180] : memref<2x8x1xf32, #tpu.memory_space<vmem>>, vector<1x8x1xf32>
      %259 = vector.shape_cast %258 : vector<1x8x1xf32> to vector<8x1xf32>
      %260 = arith.mulf %257, %259 : vector<8x1xf32>
      %cst_181 = arith.constant 3.906250e-03 : f32
      %261 = vector.broadcast %cst_181 : f32 to vector<8x1xf32>
      %262 = arith.mulf %260, %261 : vector<8x1xf32>
      %263 = arith.subf %255, %262 : vector<8x1xf32>
      %cst_182 = arith.constant 9.99999993E-9 : f32
      %264 = vector.broadcast %cst_182 : f32 to vector<8x1xf32>
      %265 = arith.addf %145, %264 : vector<8x1xf32>
      %266 = arith.divf %263, %265 : vector<8x1xf32>
      %267 = arith.mulf %266, %266 : vector<8x1xf32>
      %268 = arith.mulf %267, %145 : vector<8x1xf32>
      %cst_183 = arith.constant 2.000000e+00 : f32
      %269 = vector.broadcast %cst_183 : f32 to vector<8x1xf32>
      %270 = arith.mulf %269, %266 : vector<8x1xf32>
      %271 = arith.mulf %270, %263 : vector<8x1xf32>
      %272 = arith.subf %139, %271 : vector<8x1xf32>
      %273 = arith.addf %272, %268 : vector<8x1xf32>
      %cst_184 = arith.constant 0.000000e+00 : f32
      %274 = vector.broadcast %cst_184 : f32 to vector<8x1xf32>
      %275 = arith.maximumf %268, %274 : vector<8x1xf32>
      %276 = math.sqrt %275 : vector<8x1xf32>
      %cst_185 = arith.constant 0.000000e+00 : f32
      %277 = vector.broadcast %cst_185 : f32 to vector<8x1xf32>
      %278 = arith.maximumf %273, %277 : vector<8x1xf32>
      %279 = math.sqrt %278 : vector<8x1xf32>
      %cst_186 = arith.constant 9.99999993E-9 : f32
      %280 = vector.broadcast %cst_186 : f32 to vector<8x1xf32>
      %281 = arith.addf %279, %280 : vector<8x1xf32>
      %282 = arith.divf %276, %281 : vector<8x1xf32>
      %cst_187 = arith.constant 9.99999993E-9 : f32
      %283 = vector.broadcast %cst_187 : f32 to vector<8x1xf32>
      %284 = arith.addf %283, %282 : vector<8x1xf32>
      %285 = math.log %284 : vector<8x1xf32>
      %cst_188 = arith.constant 0.434294492 : f32
      %286 = vector.broadcast %cst_188 : f32 to vector<8x1xf32>
      %287 = arith.mulf %285, %286 : vector<8x1xf32>
      %cst_189 = arith.constant 2.000000e+01 : f32
      %288 = vector.broadcast %cst_189 : f32 to vector<8x1xf32>
      %289 = arith.mulf %288, %287 : vector<8x1xf32>
      %290 = arith.addf %181, %289 : vector<8x1xf32>
      %cst_190 = arith.constant 5.000000e-01 : f32
      %291 = vector.broadcast %cst_190 : f32 to vector<8x1xf32>
      %292 = arith.mulf %290, %291 : vector<8x1xf32>
      %293 = arith.addf %217, %253 : vector<8x1xf32>
      %cst_191 = arith.constant 5.000000e-01 : f32
      %294 = vector.broadcast %cst_191 : f32 to vector<8x1xf32>
      %295 = arith.mulf %293, %294 : vector<8x1xf32>
      %296 = arith.maximumf %292, %295 : vector<8x1xf32>
      %c0_192 = arith.constant 0 : index
      %c0_193 = arith.constant 0 : index
      %297 = vector.load %arg6[%c0_192, %c0_193] : memref<8x1xf32, #tpu.memory_space<vmem>>, vector<8x1xf32>
      tpu.vector_store %arg6[%c0_192, %c0_193], %296 {strides = array<i32>} : memref<8x1xf32, #tpu.memory_space<vmem>>, vector<8x1xf32>,
    } else {
    }
    return
  }
  func.func @transform_0(%arg0: i32, %arg1: i32) -> (i32, i32) {
    %c0_i32 = arith.constant 0 : i32
    return %arg0, %arg1 : i32, i32
  }
  func.func @transform_1(%arg0: i32, %arg1: i32) -> (i32, i32) {
    %c0_i32 = arith.constant 0 : i32
    return %arg0, %arg1 : i32, i32
  }
  func.func @transform_2(%arg0: i32, %arg1: i32) -> (i32, i32) {
    %c0_i32 = arith.constant 0 : i32
    return %arg0, %arg1 : i32, i32
  }
  func.func @transform_3(%arg0: i32, %arg1: i32) -> (i32, i32) {
    %c0_i32 = arith.constant 0 : i32
    return %arg0, %arg1 : i32, i32
  }
  func.func @transform_4(%arg0: i32, %arg1: i32) -> (i32, i32) {
    %c0_i32 = arith.constant 0 : i32
    %c0_i32_0 = arith.constant 0 : i32
    return %arg0, %c0_i32 : i32, i32
  }
}

</mosaic_0001>

<llo_original>
// kernel: tpu_custom_call.1
$region0: #{tpu_custom_call.1}
  #allocation0 [shape = 'u32[]', space=smem, size = 0x4, offset = 0x4, fixed_abs, tag = 'smem constant byte address 0x4 - core index']
  #allocation1 [shape = 'u32[144,128]{1,0:T(1,128)}', space=vmem, size = 0x12000, scoped, tag = 'internal scratch']
  #allocation2 [shape = 'f32[2,8,1]{2,1,0:T(8,128)}', space=vmem, size = 0x2000, scoped, tag = 'scratch operand']
  #allocation3 [shape = 'f32[2,8,1]{2,1,0:T(8,128)}', space=vmem, size = 0x2000, scoped, tag = 'scratch operand']
  #allocation4 [shape = 'f32[2,8,1]{2,1,0:T(8,128)}', space=vmem, size = 0x2000, scoped, tag = 'scratch operand']
  #allocation5 [shape = 'f32[2,8,1]{2,1,0:T(8,128)}', space=vmem, size = 0x2000, scoped, tag = 'scratch operand']
  #allocation6 [shape = 'f32[4,8,1]{2,1,0:T(8,128)}', space=vmem, size = 0x4000, scoped, tag = 'scratch operand']
  %s0 = inlined_call_operand.hbm [shape: f32[8,256], index: 0, kind: input, shape index: {}]
  %s1 = inlined_call_operand.hbm [shape: f32[8,256], index: 1, kind: input, shape index: {}]
  %s2 = inlined_call_operand.hbm [shape: f32[8,256], index: 2, kind: input, shape index: {}]
  %s3 = inlined_call_operand.hbm [shape: f32[8,256], index: 3, kind: input, shape index: {}]
  %s4 = inlined_call_operand.vmem [shape: f32[8,1], index: 4, kind: output, shape index: {}]
  %s5 = sld [smem:[#allocation0]]
  $region50: #{tpu_custom_call.1} parent=0
    _
  %s7 = ssub.s32 1, %s5
  %s8 = scalar_select 0, %s7, %s5
  $region1: #{tpu_custom_call.1} parent=0
    #allocation7 [shape = 'u8[8192]{0}', space=vmem, size = 0x2000, scoped, tag = 'input window, operand 0, single buffered']
    #allocation8 [shape = 's32[1]{0}', space=sflag, size = 0x4, scoped, tag = 'scoped memory for tpu_custom_call.1']
    #allocation9 [shape = 'u8[8192]{0}', space=vmem, size = 0x2000, scoped, tag = 'input window, operand 1, single buffered']
    #allocation10 [shape = 's32[1]{0}', space=sflag, size = 0x4, scoped, tag = 'scoped memory for tpu_custom_call.1']
    #allocation11 [shape = 'u8[8192]{0}', space=vmem, size = 0x2000, scoped, tag = 'input window, operand 2, single buffered']
    #allocation12 [shape = 'u8[8192]{0}', space=vmem, size = 0x2000, scoped, tag = 'input window, operand 3, single buffered']
    #allocation13 [shape = 's32[1]{0}', space=sflag, size = 0x4, scoped, tag = 'scoped memory for tpu_custom_call.1']
    %9 = vsyncpa [#allocation8], 0
    %10 = vsyncpa [#allocation10], 0
    %11 = vsyncpa [#allocation13], 0
    // Predicated region
    $region2: #{tpu_custom_call.1} parent=1 // pred_check
      _
    $region3: #{tpu_custom_call.1} parent=1 // pred_check_branch
      %13 = sbr.rel (0) target = $region5
    $region4: #{tpu_custom_call.1} parent=1 // pred_region
      %s15 = ssub.s32 256, 256
      %16 = vsyncadd [#allocation8], %s15
      %s18 = sshll.u32 [#allocation7], 4
      %s19 = int_to_ptr.vmem [resolvable:$true] %s18
      %21 = dma.hbm_to_vmem [thread:$0]  %s0, 256, %s19, [#allocation8]
    $region5: #{tpu_custom_call.1} parent=1 // pred_fallthru
      _
    // Predicated region
    $region6: #{tpu_custom_call.1} parent=1 // pred_check
      _
    $region7: #{tpu_custom_call.1} parent=1 // pred_check_branch
      %23 = sbr.rel (0) target = $region9
    $region8: #{tpu_custom_call.1} parent=1 // pred_region
      %s25 = ssub.s32 256, 256
      %26 = vsyncadd [#allocation10], %s25
      %s28 = sshll.u32 [#allocation9], 4
      %s29 = int_to_ptr.vmem [resolvable:$true] %s28
      %31 = dma.hbm_to_vmem [thread:$0]  %s1, 256, %s29, [#allocation10]
    $region9: #{tpu_custom_call.1} parent=1 // pred_fallthru
      _
    // Predicated region
    $region10: #{tpu_custom_call.1} parent=1 // pred_check
      _
    $region11: #{tpu_custom_call.1} parent=1 // pred_check_branch
      %33 = sbr.rel (0) target = $region13
    $region12: #{tpu_custom_call.1} parent=1 // pred_region
      %s35 = ssub.s32 256, 256
      %36 = vsyncadd [#allocation10], %s35
      %s38 = sshll.u32 [#allocation11], 4
      %s39 = int_to_ptr.vmem [resolvable:$true] %s38
      %41 = dma.hbm_to_vmem [thread:$0]  %s2, 256, %s39, [#allocation10]
    $region13: #{tpu_custom_call.1} parent=1 // pred_fallthru
      _
    // Predicated region
    $region14: #{tpu_custom_call.1} parent=1 // pred_check
      _
    $region15: #{tpu_custom_call.1} parent=1 // pred_check_branch
      %43 = sbr.rel (0) target = $region17
    $region16: #{tpu_custom_call.1} parent=1 // pred_region
      %s45 = ssub.s32 256, 256
      %46 = vsyncadd [#allocation13], %s45
      %s48 = sshll.u32 [#allocation12], 4
      %s49 = int_to_ptr.vmem [resolvable:$true] %s48
      %51 = dma.hbm_to_vmem [thread:$0]  %s3, 256, %s49, [#allocation13]
    $region17: #{tpu_custom_call.1} parent=1 // pred_fallthru
      _
    // Predicated region
    $region18: #{tpu_custom_call.1} parent=1 // pred_check
      _
    $region19: #{tpu_custom_call.1} parent=1 // pred_check_branch
      %53 = sbr.rel (0) target = $region21
    $region20: #{tpu_custom_call.1} parent=1 // pred_region
      %54 = dma.done [#allocation8], 256
    $region21: #{tpu_custom_call.1} parent=1 // pred_fallthru
      _
    // Predicated region
    $region22: #{tpu_custom_call.1} parent=1 // pred_check
      _
    $region23: #{tpu_custom_call.1} parent=1 // pred_check_branch
      %56 = sbr.rel (0) target = $region25
    $region24: #{tpu_custom_call.1} parent=1 // pred_region
      %57 = dma.done [#allocation10], 256
    $region25: #{tpu_custom_call.1} parent=1 // pred_fallthru
      _
    // Predicated region
    $region26: #{tpu_custom_call.1} parent=1 // pred_check
      _
    $region27: #{tpu_custom_call.1} parent=1 // pred_check_branch
      %59 = sbr.rel (0) target = $region29
    $region28: #{tpu_custom_call.1} parent=1 // pred_region
      %60 = dma.done [#allocation10], 256
    $region29: #{tpu_custom_call.1} parent=1 // pred_fallthru
      _
    // Predicated region
    $region30: #{tpu_custom_call.1} parent=1 // pred_check
      _
    $region31: #{tpu_custom_call.1} parent=1 // pred_check_branch
      %62 = sbr.rel (0) target = $region33
    $region32: #{tpu_custom_call.1} parent=1 // pred_region
      %63 = dma.done [#allocation13], 256
    $region33: #{tpu_custom_call.1} parent=1 // pred_fallthru
      _
    %p64 = scmp.eq.s32.totalorder 0, 0
    // Predicated region
    $region34: #{tpu_custom_call.1} parent=1 // pred_check
      %p65 = pneg %p64
    $region35: #{tpu_custom_call.1} parent=1 // pred_check_branch
      %67 = sbr.rel (%p65) target = $region37
    $region36: #{tpu_custom_call.1} parent=1 // pred_region
      %vm68 = vcmask 7168
      %69 = vst.msk [vmem:[#allocation2] sm:$0xff] %vm68, 0.0
      %70 = vst.msk [vmem:[#allocation2 + $0x8] sm:$0xff] %vm68, 0.0
      %71 = vst.msk [vmem:[#allocation3] sm:$0xff] %vm68, 0.0
      %72 = vst.msk [vmem:[#allocation3 + $0x8] sm:$0xff] %vm68, 0.0
      %73 = vst.msk [vmem:[#allocation4] sm:$0xff] %vm68, 0.0
      %74 = vst.msk [vmem:[#allocation4 + $0x8] sm:$0xff] %vm68, 0.0
      %75 = vst.msk [vmem:[#allocation5] sm:$0xff] %vm68, 0.0
      %76 = vst.msk [vmem:[#allocation5 + $0x8] sm:$0xff] %vm68, 0.0
      %77 = vst.msk [vmem:[#allocation6] sm:$0xff] %vm68, 0.0
      %78 = vst.msk [vmem:[#allocation6 + $0x8] sm:$0xff] %vm68, 0.0
      %79 = vst.msk [vmem:[#allocation6 + $0x10] sm:$0xff] %vm68, 0.0
      %80 = vst.msk [vmem:[#allocation6 + $0x18] sm:$0xff] %vm68, 0.0
    $region37: #{tpu_custom_call.1} parent=1 // pred_fallthru
      _
    %v81 = vld [vmem:[#allocation7] sm:$0xff]
    %v82 = vld [vmem:[#allocation7 + $0x8] sm:$0xff]
    %v83 = vld [vmem:[#allocation9] sm:$0xff]
    %v84 = vld [vmem:[#allocation9 + $0x8] sm:$0xff]
    %v85 = vld [vmem:[#allocation11] sm:$0xff]
    %v86 = vld [vmem:[#allocation11 + $0x8] sm:$0xff]
    %v87 = vld [vmem:[#allocation12] sm:$0xff]
    %v88 = vld [vmem:[#allocation12 + $0x8] sm:$0xff]
    %v89 = vld [vmem:[#allocation2] sm:$0xff]
    %v90 = vadd.f32 %v81, %v82
    %91 = vadd.xlane.f32.xlu0 %v90
    %v92 = vpop.xlane.xlu0 %91
    %v93 = vadd.f32 %v89, %v92
    %vm94 = vcmask 7168
    %95 = vst.msk [vmem:[#allocation2] sm:$0xff] %vm94, %v93
    %v96 = vld [vmem:[#allocation3] sm:$0xff]
    %v97 = vmul.f32 %v81, %v81
    %v98 = vmul.f32 %v82, %v82
    %v99 = vadd.f32 %v97, %v98
    %100 = vadd.xlane.f32.xlu0 %v99
    %v101 = vpop.xlane.xlu0 %100
    %v102 = vadd.f32 %v96, %v101
    %103 = vst.msk [vmem:[#allocation3] sm:$0xff] %vm94, %v102
    %v104 = vld [vmem:[#allocation4] sm:$0xff]
    %v105 = vadd.f32 %v85, %v86
    %106 = vadd.xlane.f32.xlu0 %v105
    %v107 = vpop.xlane.xlu0 %106
    %v108 = vadd.f32 %v104, %v107
    %109 = vst.msk [vmem:[#allocation4] sm:$0xff] %vm94, %v108
    %v110 = vld [vmem:[#allocation5] sm:$0xff]
    %v111 = vmul.f32 %v85, %v85
    %v112 = vmul.f32 %v86, %v86
    %v113 = vadd.f32 %v111, %v112
    %114 = vadd.xlane.f32.xlu0 %v113
    %v115 = vpop.xlane.xlu0 %114
    %v116 = vadd.f32 %v110, %v115
    %117 = vst.msk [vmem:[#allocation5] sm:$0xff] %vm94, %v116
    %s118 = scalar_lea.vmem [#allocation2], 8
    %v119 = vld [vmem:[%s118] sm:$0xff]
    %v120 = vadd.f32 %v83, %v84
    %121 = vadd.xlane.f32.xlu0 %v120
    %v122 = vpop.xlane.xlu0 %121
    %v123 = vadd.f32 %v119, %v122
    %124 = vst.msk [vmem:[%s118] sm:$0xff] %vm94, %v123
    %s125 = scalar_lea.vmem [#allocation3], 8
    %v126 = vld [vmem:[%s125] sm:$0xff]
    %v127 = vmul.f32 %v83, %v83
    %v128 = vmul.f32 %v84, %v84
    %v129 = vadd.f32 %v127, %v128
    %130 = vadd.xlane.f32.xlu0 %v129
    %v131 = vpop.xlane.xlu0 %130
    %v132 = vadd.f32 %v126, %v131
    %133 = vst.msk [vmem:[%s125] sm:$0xff] %vm94, %v132
    %s134 = scalar_lea.vmem [#allocation4], 8
    %v135 = vld [vmem:[%s134] sm:$0xff]
    %v136 = vadd.f32 %v87, %v88
    %137 = vadd.xlane.f32.xlu0 %v136
    %v138 = vpop.xlane.xlu0 %137
    %v139 = vadd.f32 %v135, %v138
    %140 = vst.msk [vmem:[%s134] sm:$0xff] %vm94, %v139
    %s141 = scalar_lea.vmem [#allocation5], 8
    %v142 = vld [vmem:[%s141] sm:$0xff]
    %v143 = vmul.f32 %v87, %v87
    %v144 = vmul.f32 %v88, %v88
    %v145 = vadd.f32 %v143, %v144
    %146 = vadd.xlane.f32.xlu0 %v145
    %v147 = vpop.xlane.xlu0 %146
    %v148 = vadd.f32 %v142, %v147
    %149 = vst.msk [vmem:[%s141] sm:$0xff] %vm94, %v148
    %v150 = vld [vmem:[#allocation6] sm:$0xff]
    %v151 = vmul.f32 %v81, %v85
    %v152 = vmul.f32 %v82, %v86
    %v153 = vadd.f32 %v151, %v152
    %154 = vadd.xlane.f32.xlu0 %v153
    %v155 = vpop.xlane.xlu0 %154
    %v156 = vadd.f32 %v150, %v155
    %157 = vst.msk [vmem:[#allocation6] sm:$0xff] %vm94, %v156
    %s158 = scalar_lea.vmem [#allocation6], 8
    %v159 = vld [vmem:[%s158] sm:$0xff]
    %v160 = vmul.f32 %v81, %v87
    %v161 = vmul.f32 %v82, %v88
    %v162 = vadd.f32 %v160, %v161
    %163 = vadd.xlane.f32.xlu0 %v162
    %v164 = vpop.xlane.xlu0 %163
    %v165 = vadd.f32 %v159, %v164
    %166 = vst.msk [vmem:[%s158] sm:$0xff] %vm94, %v165
    %s167 = scalar_lea.vmem [#allocation6], 16
    %v168 = vld [vmem:[%s167] sm:$0xff]
    %v169 = vmul.f32 %v83, %v85
    %v170 = vmul.f32 %v84, %v86
    %v171 = vadd.f32 %v169, %v170
    %172 = vadd.xlane.f32.xlu0 %v171
    %v173 = vpop.xlane.xlu0 %172
    %v174 = vadd.f32 %v168, %v173
    %175 = vst.msk [vmem:[%s167] sm:$0xff] %vm94, %v174
    %s176 = scalar_lea.vmem [#allocation6], 24
    %v177 = vld [vmem:[%s176] sm:$0xff]
    %v178 = vmul.f32 %v83, %v87
    %v179 = vmul.f32 %v84, %v88
    %v180 = vadd.f32 %v178, %v179
    %181 = vadd.xlane.f32.xlu0 %v180
    %v182 = vpop.xlane.xlu0 %181
    %v183 = vadd.f32 %v177, %v182
    %184 = vst.msk [vmem:[%s176] sm:$0xff] %vm94, %v183
    // Predicated region
    $region38: #{tpu_custom_call.1} parent=1 // pred_check
      %p185 = pneg %p64
    $region39: #{tpu_custom_call.1} parent=1 // pred_check_branch
      %187 = sbr.rel (%p185) target = $region41
    $region40: #{tpu_custom_call.1} parent=1 // pred_region
      %v188 = vld [vmem:[#allocation2] sm:$0xff]
      %v189 = vld [vmem:[#allocation4] sm:$0xff]
      %v190 = vld [vmem:[#allocation3] sm:$0xff]
      %v191 = vmul.f32 %v188, %v188
      %v192 = vmul.f32 %v191, 0.00390625
      %v193 = vsub.f32 %v190, %v192
      %v194 = vld [vmem:[#allocation5] sm:$0xff]
      %v195 = vmul.f32 %v189, %v189
      %v196 = vmul.f32 %v195, 0.00390625
      %v197 = vsub.f32 %v194, %v196
      %v198 = vld [vmem:[%s118] sm:$0xff]
      %v199 = vld [vmem:[%s134] sm:$0xff]
      %v200 = vld [vmem:[%s125] sm:$0xff]
      %v201 = vmul.f32 %v198, %v198
      %v202 = vmul.f32 %v201, 0.00390625
      %v203 = vsub.f32 %v200, %v202
      %v204 = vld [vmem:[%s141] sm:$0xff]
      %v205 = vmul.f32 %v199, %v199
      %v206 = vmul.f32 %v205, 0.00390625
      %v207 = vsub.f32 %v204, %v206
      %v208 = vld [vmem:[#allocation6] sm:$0xff]
      %v209 = vmul.f32 %v188, %v189
      %v210 = vmul.f32 %v209, 0.00390625
      %v211 = vsub.f32 %v208, %v210
      %v212 = vadd.f32 %v197, 1e-08
      %v213 = vrcp.pop %v212
      %v214 = vmul.f32 %v211, %v213
      %v215 = vmul.f32 %v214, %v214
      %v216 = vmul.f32 %v215, %v197
      %v217 = vmul.f32 %v214, 2.0
      %v218 = vmul.f32 %v217, %v211
      %v219 = vsub.f32 %v193, %v218
      %v220 = vadd.f32 %v219, %v216
      %v221 = vmax.f32 %v216, 0.0
      %v222 = vrsqrt.pop %v221
      %v223 = vmul.f32 %v221, %v222
      %vm224 = vcmp.eq.f32.partialorder %v221, inf
      %v225 = vsel %vm224, %v221, %v223
      %vm226 = vcmp.eq.f32.partialorder %v221, 0.0
      %v227 = vand.u32 %v221, 2147483648
      %v228 = vsel %vm226, %v227, %v225
      %v229 = vmax.f32 %v220, 0.0
      %v230 = vrsqrt.pop %v229
      %v231 = vmul.f32 %v229, %v230
      %vm232 = vcmp.eq.f32.partialorder %v229, inf
      %v233 = vsel %vm232, %v229, %v231
      %vm234 = vcmp.eq.f32.partialorder %v229, 0.0
      %v235 = vand.u32 %v229, 2147483648
      %v236 = vsel %vm234, %v235, %v233
      %v237 = vadd.f32 %v236, 1e-08
      %v238 = vrcp.pop %v237
      %v239 = vmul.f32 %v228, %v238
      %v240 = vadd.f32 %v239, 1e-08
      %v241 = vlog2.pop %v240
      %v242 = vmul.f32 %v241, 0.6931472
      %v243 = vmul.f32 %v242, 0.4342945
      %v244 = vmul.f32 %v243, 20.0
      %v245 = vld [vmem:[%s158] sm:$0xff]
      %v246 = vmul.f32 %v188, %v199
      %v247 = vmul.f32 %v246, 0.00390625
      %v248 = vsub.f32 %v245, %v247
      %v249 = vadd.f32 %v207, 1e-08
      %v250 = vrcp.pop %v249
      %v251 = vmul.f32 %v248, %v250
      %v252 = vmul.f32 %v251, %v251
      %v253 = vmul.f32 %v252, %v207
      %v254 = vmul.f32 %v251, 2.0
      %v255 = vmul.f32 %v254, %v248
      %v256 = vsub.f32 %v193, %v255
      %v257 = vadd.f32 %v256, %v253
      %v258 = vmax.f32 %v253, 0.0
      %v259 = vrsqrt.pop %v258
      %v260 = vmul.f32 %v258, %v259
      %vm261 = vcmp.eq.f32.partialorder %v258, inf
      %v262 = vsel %vm261, %v258, %v260
      %vm263 = vcmp.eq.f32.partialorder %v258, 0.0
      %v264 = vand.u32 %v258, 2147483648
      %v265 = vsel %vm263, %v264, %v262
      %v266 = vmax.f32 %v257, 0.0
      %v267 = vrsqrt.pop %v266
      %v268 = vmul.f32 %v266, %v267
      %vm269 = vcmp.eq.f32.partialorder %v266, inf
      %v270 = vsel %vm269, %v266, %v268
      %vm271 = vcmp.eq.f32.partialorder %v266, 0.0
      %v272 = vand.u32 %v266, 2147483648
      %v273 = vsel %vm271, %v272, %v270
      %v274 = vadd.f32 %v273, 1e-08
      %v275 = vrcp.pop %v274
      %v276 = vmul.f32 %v265, %v275
      %v277 = vadd.f32 %v276, 1e-08
      %v278 = vlog2.pop %v277
      %v279 = vmul.f32 %v278, 0.6931472
      %v280 = vmul.f32 %v279, 0.4342945
      %v281 = vmul.f32 %v280, 20.0
      %v282 = vld [vmem:[%s167] sm:$0xff]
      %v283 = vmul.f32 %v198, %v189
      %v284 = vmul.f32 %v283, 0.00390625
      %v285 = vsub.f32 %v282, %v284
      %v286 = vmul.f32 %v285, %v213
      %v287 = vmul.f32 %v286, %v286
      %v288 = vmul.f32 %v287, %v197
      %v289 = vmul.f32 %v286, 2.0
      %v290 = vmul.f32 %v289, %v285
      %v291 = vsub.f32 %v203, %v290
      %v292 = vadd.f32 %v291, %v288
      %v293 = vmax.f32 %v288, 0.0
      %v294 = vrsqrt.pop %v293
      %v295 = vmul.f32 %v293, %v294
      %vm296 = vcmp.eq.f32.partialorder %v293, inf
      %v297 = vsel %vm296, %v293, %v295
      %vm298 = vcmp.eq.f32.partialorder %v293, 0.0
      %v299 = vand.u32 %v293, 2147483648
      %v300 = vsel %vm298, %v299, %v297
      %v301 = vmax.f32 %v292, 0.0
      %v302 = vrsqrt.pop %v301
      %v303 = vmul.f32 %v301, %v302
      %vm304 = vcmp.eq.f32.partialorder %v301, inf
      %v305 = vsel %vm304, %v301, %v303
      %vm306 = vcmp.eq.f32.partialorder %v301, 0.0
      %v307 = vand.u32 %v301, 2147483648
      %v308 = vsel %vm306, %v307, %v305
      %v309 = vadd.f32 %v308, 1e-08
      %v310 = vrcp.pop %v309
      %v311 = vmul.f32 %v300, %v310
      %v312 = vadd.f32 %v311, 1e-08
      %v313 = vlog2.pop %v312
      %v314 = vmul.f32 %v313, 0.6931472
      %v315 = vmul.f32 %v314, 0.4342945
      %v316 = vmul.f32 %v315, 20.0
      %v317 = vld [vmem:[%s176] sm:$0xff]
      %v318 = vmul.f32 %v198, %v199
      %v319 = vmul.f32 %v318, 0.00390625
      %v320 = vsub.f32 %v317, %v319
      %v321 = vmul.f32 %v320, %v250
      %v322 = vmul.f32 %v321, %v321
      %v323 = vmul.f32 %v322, %v207
      %v324 = vmul.f32 %v321, 2.0
      %v325 = vmul.f32 %v324, %v320
      %v326 = vsub.f32 %v203, %v325
      %v327 = vadd.f32 %v326, %v323
      %v328 = vmax.f32 %v323, 0.0
      %v329 = vrsqrt.pop %v328
      %v330 = vmul.f32 %v328, %v329
      %vm331 = vcmp.eq.f32.partialorder %v328, inf
      %v332 = vsel %vm331, %v328, %v330
      %vm333 = vcmp.eq.f32.partialorder %v328, 0.0
      %v334 = vand.u32 %v328, 2147483648
      %v335 = vsel %vm333, %v334, %v332
      %v336 = vmax.f32 %v327, 0.0
      %v337 = vrsqrt.pop %v336
      %v338 = vmul.f32 %v336, %v337
      %vm339 = vcmp.eq.f32.partialorder %v336, inf
      %v340 = vsel %vm339, %v336, %v338
      %vm341 = vcmp.eq.f32.partialorder %v336, 0.0
      %v342 = vand.u32 %v336, 2147483648
      %v343 = vsel %vm341, %v342, %v340
      %v344 = vadd.f32 %v343, 1e-08
      %v345 = vrcp.pop %v344
      %v346 = vmul.f32 %v335, %v345
      %v347 = vadd.f32 %v346, 1e-08
      %v348 = vlog2.pop %v347
      %v349 = vmul.f32 %v348, 0.6931472
      %v350 = vmul.f32 %v349, 0.4342945
      %v351 = vmul.f32 %v350, 20.0
      %v352 = vadd.f32 %v244, %v351
      %v353 = vmul.f32 %v352, 0.5
      %v354 = vadd.f32 %v281, %v316
      %v355 = vmul.f32 %v354, 0.5
      %v356 = vmax.f32 %v353, %v355
      %357 = vst.msk [vmem:[%s4] sm:$0xff] %vm94, %v356
    $region41: #{tpu_custom_call.1} parent=1 // pred_fallthru
      _
    // Predicated region
    $region42: #{tpu_custom_call.1} parent=1 // pred_check
      _
    $region43: #{tpu_custom_call.1} parent=1 // pred_check_branch
      %359 = sbr.rel (0) target = $region45
    $region44: #{tpu_custom_call.1} parent=1 // pred_region
      _
    $region45: #{tpu_custom_call.1} parent=1 // pred_fallthru
      _
    // Predicated region
    $region46: #{tpu_custom_call.1} parent=1 // pred_check
      _
    $region47: #{tpu_custom_call.1} parent=1 // pred_check_branch
      %361 = sbr.rel (0) target = $region49
    $region48: #{tpu_custom_call.1} parent=1 // pred_region
      _
    $region49: #{tpu_custom_call.1} parent=1 // pred_fallthru
      _
    %362 = vsyncpa [#allocation8], 1
    %363 = vsyncpa [#allocation10], 1
    %364 = vsyncpa [#allocation13], 1

</llo_original>
